<compile_context>
chip_gen: v7x
topology: tpu7x:2x2x1
jax: 0.10.0
libtpu: 0.0.40
codegen_flags: <defaults>
</compile_context>

<pallas_src>
import functools

import jax
import jax.numpy as jnp
import numpy as np
from jax.experimental import pallas as pl
from jax.experimental.pallas import tpu as pltpu


def _coalesce_runs(perm):
    """Coalesce a static index permutation into consecutive [a, b) runs."""
    runs = []
    start = prev = perm[0]
    for p in perm[1:]:
        if p == prev + 1:
            prev = p
        else:
            runs.append((start, prev + 1))
            start = prev = p
    runs.append((start, prev + 1))
    return tuple(runs)


# ----------------------------- Pallas kernel --------------------------------
def shuffle_unit_kernel(x_ref, w1_ref, w3_ref, pk_ref, mask_ref, o_ref, *,
                        H, W, width, shuffle_runs):
    HW = H * W
    xv = x_ref[...].astype(jnp.float32)                  # (C, HW)
    x1 = xv[:width]                                      # bottleneck half
    ident = xv[width:]                                   # identity half

    pk = pk_ref[...]                                     # (width, 16) packed params
    b1 = pk[:, 9:10]
    b2 = pk[:, 10:11]
    b3 = pk[:, 11:12]
    masks = mask_ref[...]                                # (9, HW) f32 {0,1}

    # ---- conv1 (1x1, BN1 folded into rows of w1) -> relu  (MXU) ----
    h = jnp.dot(w1_ref[...], x1, preferred_element_type=jnp.float32) + b1
    h = jnp.maximum(h, 0.0)

    # ---- depthwise 3x3, stride=1, pad=1 (BN2 scale folded into taps) ----
    # shifted[p] = h[p + delta]; cross-row / cross-image wraparound is killed
    # by the precomputed boundary masks.
    acc = jnp.zeros_like(h)
    taps = [(dy - 1, dx - 1) for dy in range(3) for dx in range(3)]
    for t, (oy, ox) in enumerate(taps):
        delta = oy * W + ox
        shifted = h if delta == 0 else pltpu.roll(h, shift=(-delta) % HW, axis=1)
        acc = acc + (shifted * masks[t:t + 1, :]) * pk[:, t:t + 1]
    h = acc + b2

    # ---- conv3 (1x1, BN3 folded) -> relu  (MXU) ----
    h = jnp.dot(w3_ref[...], h, preferred_element_type=jnp.float32) + b3
    h = jnp.maximum(h, 0.0)

    # ---- fused concat + channel shuffle (groups=2): static row permutation ----
    full = jnp.concatenate([h, ident], axis=0)           # concat order (C, HW)
    shuffled = jnp.concatenate([full[a:b] for (a, b) in shuffle_runs], axis=0)
    o_ref[...] = shuffled.astype(o_ref.dtype)            # single lane-dense store


# ------------------------------- wrapper -------------------------------------
def shuffle_unit_v2_forward(x, params, *, channel_split=0.5):
    """ShuffleUnitV2 forward (stride=1, downsample=None). x: (B, C, H, W) f32."""
    B, C, H, W = x.shape
    width = int(C * channel_split)
    HW = H * W
    eps = 1e-5

    # ---- fold eval-mode BN into conv weights / bias (trace-time glue) ----
    def fold(gamma, beta, mean, var):
        scale = gamma / jnp.sqrt(var + eps)
        return scale, beta - mean * scale

    s1, b1 = fold(params["g1"], params["be1"], params["m1"], params["v1"])
    s2, b2 = fold(params["g2"], params["be2"], params["m2"], params["v2"])
    s3, b3 = fold(params["g3"], params["be3"], params["m3"], params["v3"])

    w1f = s1[:, None] * params["w1"]                         # (width, width)
    w3f = s3[:, None] * params["w3"]                         # (width, width)
    wdwf = s2[:, None] * params["wdw"].reshape(width, 9)     # (width, 9) dy-major

    # packed per-channel params: [9 dw taps | b1 | b2 | b3 | 4 pad] -> (width,16)
    pk = jnp.concatenate(
        [wdwf, b1[:, None], b2[:, None], b3[:, None],
         jnp.zeros((width, 4), jnp.float32)], axis=1)

    # 9 boundary masks for the depthwise taps (host-side constant, (9, HW) f32)
    hh = np.arange(HW) // W
    ww = np.arange(HW) % W
    taps = [(dy - 1, dx - 1) for dy in range(3) for dx in range(3)]
    masks = jnp.asarray(np.stack(
        [((hh + oy >= 0) & (hh + oy < H) & (ww + ox >= 0) & (ww + ox < W))
         for (oy, ox) in taps]).astype(np.float32))

    # channel shuffle (groups=2) of the concat [bottleneck, identity]:
    #   out[c] = concat[2c]             for c <  C//2
    #   out[c] = concat[2(c - C//2)+1]  for c >= C//2
    half = C // 2
    perm = [2 * c for c in range(half)] + [2 * c + 1 for c in range(half)]
    runs = _coalesce_runs(perm)
    # (For large real widths one would pre-permute w3f/b3 rows instead of
    #  emitting many single-row slices; at width=2 this is 4 tiny slices.)

    x_flat = x.reshape(B, C, HW)                              # free reshape

    kern = functools.partial(shuffle_unit_kernel, H=H, W=W, width=width,
                             shuffle_runs=runs)
    out_flat = pl.pallas_call(
        kern,
        out_shape=jax.ShapeDtypeStruct((B, C, HW), x.dtype),
        grid_spec=pltpu.PrefetchScalarGridSpec(
            num_scalar_prefetch=0,
            grid=(B,),
            in_specs=[
                pl.BlockSpec((None, C, HW), lambda b: (b, 0, 0)),   # full-C input
                pl.BlockSpec((width, width), lambda b: (0, 0)),     # w1 (folded)
                pl.BlockSpec((width, width), lambda b: (0, 0)),     # w3 (folded)
                pl.BlockSpec((width, 16), lambda b: (0, 0)),        # packed params
                pl.BlockSpec((9, HW), lambda b: (0, 0)),            # dw masks
            ],
            out_specs=pl.BlockSpec((None, C, HW), lambda b: (b, 0, 0)),
        ),
        compiler_params=pltpu.CompilerParams(
            dimension_semantics=("parallel",)),
    )(x_flat, w1f, w3f, pk, masks)

    return out_flat.reshape(B, C, H, W)                      # free reshape back


# ------------------------- pure-JAX reference --------------------------------
def shuffle_unit_v2_reference(x, params, *, channel_split=0.5):
    B, C, H, W = x.shape
    width = int(C * channel_split)
    eps = 1e-5
    out, identity = x[:, :width], x[:, width:]

    def bn(y, g, be, m, v):
        g, be, m, v = (t[None, :, None, None] for t in (g, be, m, v))
        return (y - m) / jnp.sqrt(v + eps) * g + be

    dn = ("NCHW", "OIHW", "NCHW")
    y = jax.lax.conv_general_dilated(out, params["w1"].reshape(width, width, 1, 1),
                                     (1, 1), "VALID", dimension_numbers=dn)
    y = jax.nn.relu(bn(y, params["g1"], params["be1"], params["m1"], params["v1"]))
    y = jax.lax.conv_general_dilated(y, params["wdw"].reshape(width, 1, 3, 3),
                                     (1, 1), ((1, 1), (1, 1)), dimension_numbers=dn,
                                     feature_group_count=width)
    y = bn(y, params["g2"], params["be2"], params["m2"], params["v2"])
    y = jax.lax.conv_general_dilated(y, params["w3"].reshape(width, width, 1, 1),
                                     (1, 1), "VALID", dimension_numbers=dn)
    y = jax.nn.relu(bn(y, params["g3"], params["be3"], params["m3"], params["v3"]))
    y = jnp.concatenate([y, identity], axis=1)
    y = y.reshape(B, C // 2, 2, H, W).transpose(0, 2, 1, 3, 4).reshape(B, C, H, W)
    return y


# --------------------------------- main ---------------------------------------
if __name__ == "__main__":
    B, C, H, W = 2, 4, 16, 16            # inplanes=4, channel_split=0.5 -> width=2
    width = C // 2

    key = jax.random.PRNGKey(0)
    keys = jax.random.split(key, 16)

    def bn_params(k):
        kg, kb, km, kv = jax.random.split(k, 4)
        return (0.5 + jax.random.uniform(kg, (width,), jnp.float32),   # gamma > 0
                0.1 * jax.random.normal(kb, (width,), jnp.float32),    # beta
                0.1 * jax.random.normal(km, (width,), jnp.float32),    # running_mean
                0.5 + jax.random.uniform(kv, (width,), jnp.float32))   # running_var > 0

    g1, be1, m1, v1 = bn_params(keys[1])
    g2, be2, m2, v2 = bn_params(keys[2])
    g3, be3, m3, v3 = bn_params(keys[3])

    params = dict(
        w1=0.5 * jax.random.normal(keys[4], (width, width), jnp.float32),
        wdw=0.5 * jax.random.normal(keys[5], (width, 3, 3), jnp.float32),
        w3=0.5 * jax.random.normal(keys[6], (width, width), jnp.float32),
        g1=g1, be1=be1, m1=m1, v1=v1,
        g2=g2, be2=be2, m2=m2, v2=v2,
        g3=g3, be3=be3, m3=m3, v3=v3,
    )

    x = jax.random.normal(keys[0], (B, C, H, W), jnp.float32)

    out = shuffle_unit_v2_forward(x, params)
    out = jax.block_until_ready(out)

    ref = jax.block_until_ready(shuffle_unit_v2_reference(x, params))
    np.testing.assert_allclose(np.asarray(out), np.asarray(ref), rtol=1e-5, atol=1e-5)
    assert out.shape == x.shape and out.dtype == x.dtype

    # TODO(synk): stride=2 / downsample path not exercised (module default downsample=None).
    print("KERNEL_OK")
</pallas_src>

<mosaic_0001>
module attributes {stable_mosaic.version = 11 : i64} {
  func.func @shuffle_unit_kernel(%arg0: i32, %arg1: memref<1x4x256xf32, #tpu.memory_space<vmem>>, %arg2: memref<2x2xf32, #tpu.memory_space<vmem>>, %arg3: memref<2x2xf32, #tpu.memory_space<vmem>>, %arg4: memref<2x16xf32, #tpu.memory_space<vmem>>, %arg5: memref<9x256xf32, #tpu.memory_space<vmem>>, %arg6: memref<1x4x256xf32, #tpu.memory_space<vmem>>) attributes {dimension_semantics = [#tpu.dimension_semantics<parallel>], iteration_bounds = array<i64: 2>, scalar_prefetch = 0 : i64, scratch_operands = 0 : i64, tpu.core_type = #tpu.core_type<tc>, window_params = [{transform_indices = @transform_0, window_bounds = array<i64: 1, 4, 256>}, {pipeline_mode = #tpu.pipeline_mode<synchronous>, transform_indices = @transform_1, window_bounds = array<i64: 2, 2>}, {pipeline_mode = #tpu.pipeline_mode<synchronous>, transform_indices = @transform_2, window_bounds = array<i64: 2, 2>}, {pipeline_mode = #tpu.pipeline_mode<synchronous>, transform_indices = @transform_3, window_bounds = array<i64: 2, 16>}, {pipeline_mode = #tpu.pipeline_mode<synchronous>, transform_indices = @transform_4, window_bounds = array<i64: 9, 256>}, {transform_indices = @transform_5, window_bounds = array<i64: 1, 4, 256>}]} {
    %c0 = arith.constant 0 : index
    %c0_0 = arith.constant 0 : index
    %c0_1 = arith.constant 0 : index
    %0 = vector.load %arg1[%c0, %c0_0, %c0_1] : memref<1x4x256xf32, #tpu.memory_space<vmem>>, vector<1x4x256xf32>
    %1 = vector.shape_cast %0 : vector<1x4x256xf32> to vector<4x256xf32>
    %2 = vector.extract_strided_slice %1 {offsets = [0, 0], sizes = [2, 256], strides = [1, 1]} : vector<4x256xf32> to vector<2x256xf32>
    %3 = vector.extract_strided_slice %1 {offsets = [2, 0], sizes = [2, 256], strides = [1, 1]} : vector<4x256xf32> to vector<2x256xf32>
    %c0_2 = arith.constant 0 : index
    %c0_3 = arith.constant 0 : index
    %4 = vector.load %arg4[%c0_2, %c0_3] : memref<2x16xf32, #tpu.memory_space<vmem>>, vector<2x16xf32>
    %5 = vector.extract_strided_slice %4 {offsets = [0, 9], sizes = [2, 1], strides = [1, 1]} : vector<2x16xf32> to vector<2x1xf32>
    %6 = vector.extract_strided_slice %4 {offsets = [0, 10], sizes = [2, 1], strides = [1, 1]} : vector<2x16xf32> to vector<2x1xf32>
    %7 = vector.extract_strided_slice %4 {offsets = [0, 11], sizes = [2, 1], strides = [1, 1]} : vector<2x16xf32> to vector<2x1xf32>
    %c0_4 = arith.constant 0 : index
    %c0_5 = arith.constant 0 : index
    %8 = vector.load %arg5[%c0_4, %c0_5] : memref<9x256xf32, #tpu.memory_space<vmem>>, vector<9x256xf32>
    %c0_6 = arith.constant 0 : index
    %c0_7 = arith.constant 0 : index
    %9 = vector.load %arg2[%c0_6, %c0_7] : memref<2x2xf32, #tpu.memory_space<vmem>>, vector<2x2xf32>
    %cst = arith.constant dense<0.000000e+00> : vector<2x256xf32>
    %10 = tpu.matmul %9, %2, %cst {dimension_numbers = #tpu.dot_dimension_numbers<[1], [0], [0], [1], [0, 0, 1, 1], [], []>} : vector<2x2xf32>, vector<2x256xf32>, vector<2x256xf32> -> vector<2x256xf32>
    %11 = vector.broadcast %5 : vector<2x1xf32> to vector<2x256xf32>
    %12 = arith.addf %10, %11 : vector<2x256xf32>
    %cst_8 = arith.constant 0.000000e+00 : f32
    %13 = vector.broadcast %cst_8 : f32 to vector<2x256xf32>
    %14 = arith.maximumf %12, %13 : vector<2x256xf32>
    %cst_9 = arith.constant 0.000000e+00 : f32
    %15 = vector.broadcast %cst_9 : f32 to vector<2x256xf32>
    %c17_i32 = arith.constant 17 : i32
    %16 = tpu.dynamic_rotate %14 by %c17_i32 dim 1 : vector<2x256xf32>, i32 -> vector<2x256xf32>
    %17 = vector.extract_strided_slice %8 {offsets = [0, 0], sizes = [1, 256], strides = [1, 1]} : vector<9x256xf32> to vector<1x256xf32>
    %18 = vector.broadcast %17 : vector<1x256xf32> to vector<2x256xf32>
    %19 = arith.mulf %16, %18 : vector<2x256xf32>
    %20 = vector.extract_strided_slice %4 {offsets = [0, 0], sizes = [2, 1], strides = [1, 1]} : vector<2x16xf32> to vector<2x1xf32>
    %21 = vector.broadcast %20 : vector<2x1xf32> to vector<2x256xf32>
    %22 = arith.mulf %19, %21 : vector<2x256xf32>
    %23 = arith.addf %15, %22 : vector<2x256xf32>
    %c16_i32 = arith.constant 16 : i32
    %24 = tpu.dynamic_rotate %14 by %c16_i32 dim 1 : vector<2x256xf32>, i32 -> vector<2x256xf32>
    %25 = vector.extract_strided_slice %8 {offsets = [1, 0], sizes = [1, 256], strides = [1, 1]} : vector<9x256xf32> to vector<1x256xf32>
    %26 = vector.broadcast %25 : vector<1x256xf32> to vector<2x256xf32>
    %27 = arith.mulf %24, %26 : vector<2x256xf32>
    %28 = vector.extract_strided_slice %4 {offsets = [0, 1], sizes = [2, 1], strides = [1, 1]} : vector<2x16xf32> to vector<2x1xf32>
    %29 = vector.broadcast %28 : vector<2x1xf32> to vector<2x256xf32>
    %30 = arith.mulf %27, %29 : vector<2x256xf32>
    %31 = arith.addf %23, %30 : vector<2x256xf32>
    %c15_i32 = arith.constant 15 : i32
    %32 = tpu.dynamic_rotate %14 by %c15_i32 dim 1 : vector<2x256xf32>, i32 -> vector<2x256xf32>
    %33 = vector.extract_strided_slice %8 {offsets = [2, 0], sizes = [1, 256], strides = [1, 1]} : vector<9x256xf32> to vector<1x256xf32>
    %34 = vector.broadcast %33 : vector<1x256xf32> to vector<2x256xf32>
    %35 = arith.mulf %32, %34 : vector<2x256xf32>
    %36 = vector.extract_strided_slice %4 {offsets = [0, 2], sizes = [2, 1], strides = [1, 1]} : vector<2x16xf32> to vector<2x1xf32>
    %37 = vector.broadcast %36 : vector<2x1xf32> to vector<2x256xf32>
    %38 = arith.mulf %35, %37 : vector<2x256xf32>
    %39 = arith.addf %31, %38 : vector<2x256xf32>
    %c1_i32 = arith.constant 1 : i32
    %40 = tpu.dynamic_rotate %14 by %c1_i32 dim 1 : vector<2x256xf32>, i32 -> vector<2x256xf32>
    %41 = vector.extract_strided_slice %8 {offsets = [3, 0], sizes = [1, 256], strides = [1, 1]} : vector<9x256xf32> to vector<1x256xf32>
    %42 = vector.broadcast %41 : vector<1x256xf32> to vector<2x256xf32>
    %43 = arith.mulf %40, %42 : vector<2x256xf32>
    %44 = vector.extract_strided_slice %4 {offsets = [0, 3], sizes = [2, 1], strides = [1, 1]} : vector<2x16xf32> to vector<2x1xf32>
    %45 = vector.broadcast %44 : vector<2x1xf32> to vector<2x256xf32>
    %46 = arith.mulf %43, %45 : vector<2x256xf32>
    %47 = arith.addf %39, %46 : vector<2x256xf32>
    %48 = vector.extract_strided_slice %8 {offsets = [4, 0], sizes = [1, 256], strides = [1, 1]} : vector<9x256xf32> to vector<1x256xf32>
    %49 = vector.broadcast %48 : vector<1x256xf32> to vector<2x256xf32>
    %50 = arith.mulf %14, %49 : vector<2x256xf32>
    %51 = vector.extract_strided_slice %4 {offsets = [0, 4], sizes = [2, 1], strides = [1, 1]} : vector<2x16xf32> to vector<2x1xf32>
    %52 = vector.broadcast %51 : vector<2x1xf32> to vector<2x256xf32>
    %53 = arith.mulf %50, %52 : vector<2x256xf32>
    %54 = arith.addf %47, %53 : vector<2x256xf32>
    %c255_i32 = arith.constant 255 : i32
    %55 = tpu.dynamic_rotate %14 by %c255_i32 dim 1 : vector<2x256xf32>, i32 -> vector<2x256xf32>
    %56 = vector.extract_strided_slice %8 {offsets = [5, 0], sizes = [1, 256], strides = [1, 1]} : vector<9x256xf32> to vector<1x256xf32>
    %57 = vector.broadcast %56 : vector<1x256xf32> to vector<2x256xf32>
    %58 = arith.mulf %55, %57 : vector<2x256xf32>
    %59 = vector.extract_strided_slice %4 {offsets = [0, 5], sizes = [2, 1], strides = [1, 1]} : vector<2x16xf32> to vector<2x1xf32>
    %60 = vector.broadcast %59 : vector<2x1xf32> to vector<2x256xf32>
    %61 = arith.mulf %58, %60 : vector<2x256xf32>
    %62 = arith.addf %54, %61 : vector<2x256xf32>
    %c241_i32 = arith.constant 241 : i32
    %63 = tpu.dynamic_rotate %14 by %c241_i32 dim 1 : vector<2x256xf32>, i32 -> vector<2x256xf32>
    %64 = vector.extract_strided_slice %8 {offsets = [6, 0], sizes = [1, 256], strides = [1, 1]} : vector<9x256xf32> to vector<1x256xf32>
    %65 = vector.broadcast %64 : vector<1x256xf32> to vector<2x256xf32>
    %66 = arith.mulf %63, %65 : vector<2x256xf32>
    %67 = vector.extract_strided_slice %4 {offsets = [0, 6], sizes = [2, 1], strides = [1, 1]} : vector<2x16xf32> to vector<2x1xf32>
    %68 = vector.broadcast %67 : vector<2x1xf32> to vector<2x256xf32>
    %69 = arith.mulf %66, %68 : vector<2x256xf32>
    %70 = arith.addf %62, %69 : vector<2x256xf32>
    %c240_i32 = arith.constant 240 : i32
    %71 = tpu.dynamic_rotate %14 by %c240_i32 dim 1 : vector<2x256xf32>, i32 -> vector<2x256xf32>
    %72 = vector.extract_strided_slice %8 {offsets = [7, 0], sizes = [1, 256], strides = [1, 1]} : vector<9x256xf32> to vector<1x256xf32>
    %73 = vector.broadcast %72 : vector<1x256xf32> to vector<2x256xf32>
    %74 = arith.mulf %71, %73 : vector<2x256xf32>
    %75 = vector.extract_strided_slice %4 {offsets = [0, 7], sizes = [2, 1], strides = [1, 1]} : vector<2x16xf32> to vector<2x1xf32>
    %76 = vector.broadcast %75 : vector<2x1xf32> to vector<2x256xf32>
    %77 = arith.mulf %74, %76 : vector<2x256xf32>
    %78 = arith.addf %70, %77 : vector<2x256xf32>
    %c239_i32 = arith.constant 239 : i32
    %79 = tpu.dynamic_rotate %14 by %c239_i32 dim 1 : vector<2x256xf32>, i32 -> vector<2x256xf32>
    %80 = vector.extract_strided_slice %8 {offsets = [8, 0], sizes = [1, 256], strides = [1, 1]} : vector<9x256xf32> to vector<1x256xf32>
    %81 = vector.broadcast %80 : vector<1x256xf32> to vector<2x256xf32>
    %82 = arith.mulf %79, %81 : vector<2x256xf32>
    %83 = vector.extract_strided_slice %4 {offsets = [0, 8], sizes = [2, 1], strides = [1, 1]} : vector<2x16xf32> to vector<2x1xf32>
    %84 = vector.broadcast %83 : vector<2x1xf32> to vector<2x256xf32>
    %85 = arith.mulf %82, %84 : vector<2x256xf32>
    %86 = arith.addf %78, %85 : vector<2x256xf32>
    %87 = vector.broadcast %6 : vector<2x1xf32> to vector<2x256xf32>
    %88 = arith.addf %86, %87 : vector<2x256xf32>
    %c0_10 = arith.constant 0 : index
    %c0_11 = arith.constant 0 : index
    %89 = vector.load %arg3[%c0_10, %c0_11] : memref<2x2xf32, #tpu.memory_space<vmem>>, vector<2x2xf32>
    %cst_12 = arith.constant dense<0.000000e+00> : vector<2x256xf32>
    %90 = tpu.matmul %89, %88, %cst_12 {dimension_numbers = #tpu.dot_dimension_numbers<[1], [0], [0], [1], [0, 0, 1, 1], [], []>} : vector<2x2xf32>, vector<2x256xf32>, vector<2x256xf32> -> vector<2x256xf32>
    %91 = vector.broadcast %7 : vector<2x1xf32> to vector<2x256xf32>
    %92 = arith.addf %90, %91 : vector<2x256xf32>
    %cst_13 = arith.constant 0.000000e+00 : f32
    %93 = vector.broadcast %cst_13 : f32 to vector<2x256xf32>
    %94 = arith.maximumf %92, %93 : vector<2x256xf32>
    %95 = tpu.concatenate %94, %3 in 0 : vector<2x256xf32>, vector<2x256xf32> -> vector<4x256xf32>
    %96 = vector.extract_strided_slice %95 {offsets = [0, 0], sizes = [1, 256], strides = [1, 1]} : vector<4x256xf32> to vector<1x256xf32>
    %97 = vector.extract_strided_slice %95 {offsets = [2, 0], sizes = [1, 256], strides = [1, 1]} : vector<4x256xf32> to vector<1x256xf32>
    %98 = vector.extract_strided_slice %95 {offsets = [1, 0], sizes = [1, 256], strides = [1, 1]} : vector<4x256xf32> to vector<1x256xf32>
    %99 = vector.extract_strided_slice %95 {offsets = [3, 0], sizes = [1, 256], strides = [1, 1]} : vector<4x256xf32> to vector<1x256xf32>
    %100 = tpu.concatenate %96, %97, %98, %99 in 0 : vector<1x256xf32>, vector<1x256xf32>, vector<1x256xf32>, vector<1x256xf32> -> vector<4x256xf32>
    %c0_14 = arith.constant 0 : index
    %c0_15 = arith.constant 0 : index
    %c0_16 = arith.constant 0 : index
    %101 = vector.load %arg6[%c0_14, %c0_15, %c0_16] : memref<1x4x256xf32, #tpu.memory_space<vmem>>, vector<1x4x256xf32>
    %102 = vector.shape_cast %101 : vector<1x4x256xf32> to vector<4x256xf32>
    %103 = vector.shape_cast %100 : vector<4x256xf32> to vector<1x4x256xf32>
    tpu.vector_store %arg6[%c0_14, %c0_15, %c0_16], %103 {strides = array<i32>} : memref<1x4x256xf32, #tpu.memory_space<vmem>>, vector<1x4x256xf32>,
    return
  }
  func.func @transform_0(%arg0: i32) -> (i32, i32, i32) {
    %c0_i32 = arith.constant 0 : i32
    %c0_i32_0 = arith.constant 0 : i32
    %c0_i32_1 = arith.constant 0 : i32
    return %arg0, %c0_i32, %c0_i32_0 : i32, i32, i32
  }
  func.func @transform_1(%arg0: i32) -> (i32, i32) {
    %c0_i32 = arith.constant 0 : i32
    %c0_i32_0 = arith.constant 0 : i32
    %c0_i32_1 = arith.constant 0 : i32
    return %c0_i32, %c0_i32_0 : i32, i32
  }
  func.func @transform_2(%arg0: i32) -> (i32, i32) {
    %c0_i32 = arith.constant 0 : i32
    %c0_i32_0 = arith.constant 0 : i32
    %c0_i32_1 = arith.constant 0 : i32
    return %c0_i32, %c0_i32_0 : i32, i32
  }
  func.func @transform_3(%arg0: i32) -> (i32, i32) {
    %c0_i32 = arith.constant 0 : i32
    %c0_i32_0 = arith.constant 0 : i32
    %c0_i32_1 = arith.constant 0 : i32
    return %c0_i32, %c0_i32_0 : i32, i32
  }
  func.func @transform_4(%arg0: i32) -> (i32, i32) {
    %c0_i32 = arith.constant 0 : i32
    %c0_i32_0 = arith.constant 0 : i32
    %c0_i32_1 = arith.constant 0 : i32
    return %c0_i32, %c0_i32_0 : i32, i32
  }
  func.func @transform_5(%arg0: i32) -> (i32, i32, i32) {
    %c0_i32 = arith.constant 0 : i32
    %c0_i32_0 = arith.constant 0 : i32
    %c0_i32_1 = arith.constant 0 : i32
    return %arg0, %c0_i32, %c0_i32_0 : i32, i32, i32
  }
}

</mosaic_0001>

<llo_original>
// kernel: tpu_custom_call.1
$region0: #{tpu_custom_call.1}
  #allocation0 [shape = 'u32[]', space=smem, size = 0x4, offset = 0x4, fixed_abs, tag = 'smem constant byte address 0x4 - core index']
  #allocation1 [shape = 'u32[144,128]{1,0:T(1,128)}', space=vmem, size = 0x12000, scoped, tag = 'internal scratch']
  %s0 = inlined_call_operand.hbm [shape: f32[2,4,256], index: 0, kind: input, shape index: {}]
  %s1 = inlined_call_operand.vmem [shape: f32[2,2], index: 1, kind: input, shape index: {}]
  %s2 = inlined_call_operand.vmem [shape: f32[2,2], index: 2, kind: input, shape index: {}]
  %s3 = inlined_call_operand.vmem [shape: f32[2,16], index: 3, kind: input, shape index: {}]
  %s4 = inlined_call_operand.hbm [shape: f32[9,256], index: 4, kind: input, shape index: {}]
  %s5 = inlined_call_operand.hbm [shape: f32[2,4,256], index: 5, kind: output, shape index: {}]
  %s6 = sld [smem:[#allocation0]]
  $region61: #{tpu_custom_call.1} parent=0
    _
  %s8 = ssub.s32 1, %s6
  %s9 = scalar_select 0, %s8, %s6
  $region1: #{tpu_custom_call.1} parent=0
    #allocation2 [shape = 'u8[8192]{0}', space=vmem, size = 0x2000, scoped, tag = 'input window, operand 0']
    #allocation3 [shape = 's32[2]{0}', space=sflag, size = 0x8, scoped, tag = 'scoped memory for tpu_custom_call.1']
    #allocation4 [shape = 's32[2]{0}', space=sflag, size = 0x8, scoped, tag = 'scoped memory for tpu_custom_call.1']
    #allocation5 [shape = 'u8[16384]{0}', space=vmem, size = 0x4000, scoped, tag = 'input window, operand 4, single buffered']
    #allocation6 [shape = 's32[1]{0}', space=sflag, size = 0x4, scoped, tag = 'scoped memory for tpu_custom_call.1']
    #allocation7 [shape = 'u8[8192]{0}', space=vmem, size = 0x2000, scoped, tag = 'output window, operand 0']
    %10 = vsyncpa [#allocation3], 0
    %s11 = scalar_lea.sflag [#allocation3], 1
    %12 = vsyncpa %s11, 0
    %13 = vsyncpa [#allocation6], 0
    %14 = vsyncpa [#allocation4], 0
    %s15 = scalar_lea.sflag [#allocation4], 1
    %16 = vsyncpa %s15, 0
    loop: start=0, step=1, limit=4
    $region2: #{tpu_custom_call.1} parent=1 // loop_pre_header
      _
    $region3: #{tpu_custom_call.1} parent=1 // loop_header
      %s18 = sphi 0, %s22
      %p19 = scmp.ge.s32.totalorder %s18, 4
      %s28 = sphi 0, %s30
      %s31 = sphi 0, %s28
      %s32 = sphi 0, %s31
      %s48 = sphi 0, %s32
      %s52 = sphi 0, %s52
      %s54 = sphi 0, %s52
      %s55 = sphi 0, %s54
      %s69 = sphi 0, %s55
      %s73 = sphi 0, %s73
      %s75 = sphi 0, %s73
      %s76 = sphi 0, %s75
      %s90 = sphi 0, %s76
      %s94 = sphi 0, %s94
      %s96 = sphi 0, %s94
      %s97 = sphi 0, %s96
      %s111 = sphi 0, %s97
      %s115 = sphi 0, %s115
      %s117 = sphi 0, %s115
      %s118 = sphi 0, %s117
      %s132 = sphi 0, %s118
      %s138 = sphi 0, %s140
      %s141 = sphi 0, %s138
      %s142 = sphi 0, %s141
      %s158 = sphi 0, %s142
    $region4: #{tpu_custom_call.1} parent=1 // loop_header_branch
      %21 = sbr.rel (%p19) target = $region8
    $region5: #{tpu_custom_call.1} parent=1 // loop_body
      %s23 = ssub.s32 %s18, 1
      %s24 = ssub.s32 %s18, 2
      %s25 = sadd.s32 %s18, 1
      %s26 = ssub.s32 %s18, %s25
      %p27 = scmp.eq.s32.totalorder %s26, 0
      %s29 = sadd.s32 %s28, 1
      %s30 = scalar_select %p27, %s28, %s29
      %p33 = pneg %p27
      %p34 = scmp.eq.s32.totalorder %s18, 1
      %p35 = por %p33, %p34
      %p36 = scmp.ne.s32.totalorder %s28, %s31
      %p37 = scmp.eq.s32.totalorder %s18, 0
      %p38 = por %p36, %p37
      %p39 = scmp.ne.s32.totalorder %s28, %s31
      %p40 = scmp.eq.s32.totalorder %s23, 1
      %p41 = por %p39, %p40
      %p42 = scmp.ne.s32.totalorder %s31, %s32
      %p43 = scmp.eq.s32.totalorder %s23, 0
      %p44 = por %p42, %p43
      %p45 = scmp.ne.s32.totalorder %s31, %s32
      %p46 = scmp.eq.s32.totalorder %s24, 1
      %p47 = por %p45, %p46
      %p49 = scmp.ne.s32.totalorder %s32, %s48
      %p50 = scmp.eq.s32.totalorder %s24, 0
      %p51 = por %p49, %p50
      %s53 = sadd.s32 %s52, 1
      %p56 = scmp.eq.s32.totalorder %s18, 1
      %p57 = scmp.ne.s32.totalorder %s52, %s54
      %p58 = scmp.eq.s32.totalorder %s18, 0
      %p59 = por %p57, %p58
      %p60 = scmp.ne.s32.totalorder %s52, %s54
      %p61 = scmp.eq.s32.totalorder %s23, 1
      %p62 = por %p60, %p61
      %p63 = scmp.ne.s32.totalorder %s54, %s55
      %p64 = scmp.eq.s32.totalorder %s23, 0
      %p65 = por %p63, %p64
      %p66 = scmp.ne.s32.totalorder %s54, %s55
      %p67 = scmp.eq.s32.totalorder %s24, 1
      %p68 = por %p66, %p67
      %p70 = scmp.ne.s32.totalorder %s55, %s69
      %p71 = scmp.eq.s32.totalorder %s24, 0
      %p72 = por %p70, %p71
      %s74 = sadd.s32 %s73, 1
      %p77 = scmp.eq.s32.totalorder %s18, 1
      %p78 = scmp.ne.s32.totalorder %s73, %s75
      %p79 = scmp.eq.s32.totalorder %s18, 0
      %p80 = por %p78, %p79
      %p81 = scmp.ne.s32.totalorder %s73, %s75
      %p82 = scmp.eq.s32.totalorder %s23, 1
      %p83 = por %p81, %p82
      %p84 = scmp.ne.s32.totalorder %s75, %s76
      %p85 = scmp.eq.s32.totalorder %s23, 0
      %p86 = por %p84, %p85
      %p87 = scmp.ne.s32.totalorder %s75, %s76
      %p88 = scmp.eq.s32.totalorder %s24, 1
      %p89 = por %p87, %p88
      %p91 = scmp.ne.s32.totalorder %s76, %s90
      %p92 = scmp.eq.s32.totalorder %s24, 0
      %p93 = por %p91, %p92
      %s95 = sadd.s32 %s94, 1
      %p98 = scmp.eq.s32.totalorder %s18, 1
      %p99 = scmp.ne.s32.totalorder %s94, %s96
      %p100 = scmp.eq.s32.totalorder %s18, 0
      %p101 = por %p99, %p100
      %p102 = scmp.ne.s32.totalorder %s94, %s96
      %p103 = scmp.eq.s32.totalorder %s23, 1
      %p104 = por %p102, %p103
      %p105 = scmp.ne.s32.totalorder %s96, %s97
      %p106 = scmp.eq.s32.totalorder %s23, 0
      %p107 = por %p105, %p106
      %p108 = scmp.ne.s32.totalorder %s96, %s97
      %p109 = scmp.eq.s32.totalorder %s24, 1
      %p110 = por %p108, %p109
      %p112 = scmp.ne.s32.totalorder %s97, %s111
      %p113 = scmp.eq.s32.totalorder %s24, 0
      %p114 = por %p112, %p113
      %s116 = sadd.s32 %s115, 1
      %p119 = scmp.eq.s32.totalorder %s18, 1
      %p120 = scmp.ne.s32.totalorder %s115, %s117
      %p121 = scmp.eq.s32.totalorder %s18, 0
      %p122 = por %p120, %p121
      %p123 = scmp.ne.s32.totalorder %s115, %s117
      %p124 = scmp.eq.s32.totalorder %s23, 1
      %p125 = por %p123, %p124
      %p126 = scmp.ne.s32.totalorder %s117, %s118
      %p127 = scmp.eq.s32.totalorder %s23, 0
      %p128 = por %p126, %p127
      %p129 = scmp.ne.s32.totalorder %s117, %s118
      %p130 = scmp.eq.s32.totalorder %s24, 1
      %p131 = por %p129, %p130
      %p133 = scmp.ne.s32.totalorder %s118, %s132
      %p134 = scmp.eq.s32.totalorder %s24, 0
      %p135 = por %p133, %p134
      %s136 = ssub.s32 %s18, %s25
      %p137 = scmp.eq.s32.totalorder %s136, 0
      %s139 = sadd.s32 %s138, 1
      %s140 = scalar_select %p137, %s138, %s139
      %p143 = pneg %p137
      %p144 = scmp.eq.s32.totalorder %s18, 1
      %p145 = por %p143, %p144
      %p146 = scmp.ne.s32.totalorder %s138, %s141
      %p147 = scmp.eq.s32.totalorder %s18, 0
      %p148 = por %p146, %p147
      %p149 = scmp.ne.s32.totalorder %s138, %s141
      %p150 = scmp.eq.s32.totalorder %s23, 1
      %p151 = por %p149, %p150
      %p152 = scmp.ne.s32.totalorder %s141, %s142
      %p153 = scmp.eq.s32.totalorder %s23, 0
      %p154 = por %p152, %p153
      %p155 = scmp.ne.s32.totalorder %s141, %s142
      %p156 = scmp.eq.s32.totalorder %s24, 1
      %p157 = por %p155, %p156
      %p159 = scmp.ne.s32.totalorder %s142, %s158
      %p160 = scmp.eq.s32.totalorder %s24, 0
      %p161 = por %p159, %p160
      %p162 = scmp.le.s32.totalorder 1, %s18
      %p163 = scmp.lt.s32.totalorder %s18, 3
      %p164 = pnand %p162, %p163
      %p165 = pneg %p164
      // Predicated region
      $region9: #{tpu_custom_call.1} parent=5 // pred_check
        _
      $region10: #{tpu_custom_call.1} parent=5 // pred_check_branch
        %167 = sbr.rel (%p164) target = $region12
      $region11: #{tpu_custom_call.1} parent=5 // pred_region
        %s168 = ssub.s32 %s18, 1
        // Predicated region
        $region13: #{tpu_custom_call.1} parent=11 // pred_check
          %p169 = pneg %p65
        $region14: #{tpu_custom_call.1} parent=11 // pred_check_branch
          %171 = sbr.rel (%p169) target = $region16
        $region15: #{tpu_custom_call.1} parent=11 // pred_region
          _
        $region16: #{tpu_custom_call.1} parent=11 // pred_fallthru
          _
        // Predicated region
        $region17: #{tpu_custom_call.1} parent=11 // pred_check
          %p172 = pneg %p86
        $region18: #{tpu_custom_call.1} parent=11 // pred_check_branch
          %174 = sbr.rel (%p172) target = $region20
        $region19: #{tpu_custom_call.1} parent=11 // pred_region
          _
        $region20: #{tpu_custom_call.1} parent=11 // pred_fallthru
          _
        // Predicated region
        $region21: #{tpu_custom_call.1} parent=11 // pred_check
          %p175 = pneg %p107
        $region22: #{tpu_custom_call.1} parent=11 // pred_check_branch
          %177 = sbr.rel (%p175) target = $region24
        $region23: #{tpu_custom_call.1} parent=11 // pred_region
          _
        $region24: #{tpu_custom_call.1} parent=11 // pred_fallthru
          _
        // Predicated region
        $region25: #{tpu_custom_call.1} parent=11 // pred_check
          %p178 = pneg %p128
        $region26: #{tpu_custom_call.1} parent=11 // pred_check_branch
          %180 = sbr.rel (%p178) target = $region28
        $region27: #{tpu_custom_call.1} parent=11 // pred_region
          %s182 = ssub.s32 512, 512
          %183 = vsyncadd [#allocation6], %s182
          %s184 = sshll.u32 [#allocation5], 4
          %s185 = int_to_ptr.vmem [resolvable:$true] %s184
          %190 = dma.hbm_to_vmem [thread:$0]  %s4, 512, %s185, [#allocation6], 256, 256, 16
        $region28: #{tpu_custom_call.1} parent=11 // pred_fallthru
          _
      $region12: #{tpu_custom_call.1} parent=5 // pred_fallthru
        _
      %p191 = scmp.lt.s32.totalorder %s18, 2
      // Predicated region
      $region29: #{tpu_custom_call.1} parent=5 // pred_check
        %p192 = pneg %p191
      $region30: #{tpu_custom_call.1} parent=5 // pred_check_branch
        %194 = sbr.rel (%p192) target = $region32
      $region31: #{tpu_custom_call.1} parent=5 // pred_region
        // Predicated region
        $region33: #{tpu_custom_call.1} parent=31 // pred_check
          %p195 = pneg %p38
        $region34: #{tpu_custom_call.1} parent=31 // pred_check_branch
          %197 = sbr.rel (%p195) target = $region36
        $region35: #{tpu_custom_call.1} parent=31 // pred_region
          %s198 = sand.u32 %s28, 1
          %s199 = scalar_lea.sflag [#allocation3], %s198
          %s200 = sand.u32 %s28, 1
          %s201 = smul.addr %s200, 8
          %s202 = scalar_lea.vmem [#allocation2], %s201
          %s204 = ssub.s32 128, 128
          %205 = vsyncadd %s199, %s204
          %s206 = smul.addr %s18, 2
          %s207 = smul.addr %s206, 64
          %s208 = scalar_lea.hbm %s0, %s207
          %s210 = sshll.u32 %s202, 4
          %s211 = int_to_ptr.vmem [resolvable:$true] %s210
          %213 = dma.hbm_to_vmem [thread:$0]  %s208, 128, %s211, %s199
        $region36: #{tpu_custom_call.1} parent=31 // pred_fallthru
          _
      $region32: #{tpu_custom_call.1} parent=5 // pred_fallthru
        _
      %p214 = scmp.le.s32.totalorder 1, %s18
      %p215 = scmp.lt.s32.totalorder %s18, 3
      %p216 = pnand %p214, %p215
      %p217 = pneg %p216
      // Predicated region
      $region37: #{tpu_custom_call.1} parent=5 // pred_check
        _
      $region38: #{tpu_custom_call.1} parent=5 // pred_check_branch
        %219 = sbr.rel (%p216) target = $region40
      $region39: #{tpu_custom_call.1} parent=5 // pred_region
        %s220 = ssub.s32 %s18, 1
        %s221 = sand.u32 %s31, 1
        %s222 = scalar_lea.sflag [#allocation3], %s221
        %s223 = sand.u32 %s31, 1
        %s224 = smul.addr %s223, 8
        %s225 = scalar_lea.vmem [#allocation2], %s224
        // Predicated region
        $region41: #{tpu_custom_call.1} parent=39 // pred_check
          %p226 = pneg %p44
        $region42: #{tpu_custom_call.1} parent=39 // pred_check_branch
          %228 = sbr.rel (%p226) target = $region44
        $region43: #{tpu_custom_call.1} parent=39 // pred_region
          %229 = dma.done %s222, 128
        $region44: #{tpu_custom_call.1} parent=39 // pred_fallthru
          _
        // Predicated region
        $region45: #{tpu_custom_call.1} parent=39 // pred_check
          %p230 = pneg %p128
        $region46: #{tpu_custom_call.1} parent=39 // pred_check_branch
          %232 = sbr.rel (%p230) target = $region48
        $region47: #{tpu_custom_call.1} parent=39 // pred_region
          %233 = dma.done [#allocation6], 512
        $region48: #{tpu_custom_call.1} parent=39 // pred_fallthru
          _
        %s234 = sand.u32 %s31, 1
        %s235 = scalar_lea.sflag [#allocation3], %s234
        %s236 = sand.u32 %s31, 1
        %s237 = smul.addr %s236, 8
        %s238 = scalar_lea.vmem [#allocation2], %s237
        %p239 = pneg %p44
        %p240 = pneg %p41
        %p241 = pneg %p65
        %p242 = pneg %p62
        %p243 = pneg %p86
        %p244 = pneg %p83
        %p245 = pneg %p107
        %p246 = pneg %p104
        %p247 = pneg %p128
        %p248 = pneg %p125
        %p249 = pneg %p154
        %p250 = pneg %p151
        %s251 = sand.u32 %s141, 1
        %s252 = scalar_lea.sflag [#allocation4], %s251
        %s253 = sand.u32 %s141, 1
        %s254 = smul.addr %s253, 8
        %s255 = scalar_lea.vmem [#allocation7], %s254
        %v256 = vld [vmem:[%s225] sm:$0xff]
        %v257 = vld [vmem:[%s3] sm:$0x3]
        %v258 = vld [vmem:[#allocation5] sm:$0xff]
        %v259 = vld [vmem:[#allocation5 + $0x8] sm:$0xff]
        %v260 = vld [vmem:[#allocation5 + $0x10] sm:$0x1]
        %v261 = vld [vmem:[#allocation5 + $0x18] sm:$0x1]
        %v262 = vld [vmem:[%s1] sm:$0x3]
        %264 = vset.pattern.permute.xlu0 9
        %265 = vperm.xlu0 %264, %v257
        %v266 = vpop.permute.xlu0 %265
        %v269 = vcombine.high %v256, %v256
        %vm270 = vcmask 15360
        %v272 = vsel %vm270, %v262, 0
        %vm274 = vcmask 1041408
        %v275 = vsel %vm274, %v256, 0
        %v277 = vsel %vm274, %v269, 0
        %279 = vmatprep.subr.mxu0 %v277
        %280 = vmatpush1.msra.mxu0 %v275
        %281 = vmatprep.subr.mxu0 0.0
        %282 = vmatpush1.msra.mxu0 0.0
        %283 = vmatprep.subr.mxu0 0.0
        %284 = vmatpush1.msra.mxu0 0.0
        %285 = vmatprep.subr.mxu0 0.0
        %286 = vmatpush1.msra.mxu0 0.0
        %287 = vmatprep.subr.mxu0 0.0
        %288 = vmatpush1.msra.mxu0 0.0
        %289 = vmatprep.subr.mxu0 0.0
        %290 = vmatpush1.msra.mxu0 0.0
        %291 = vmatprep.subr.mxu0 0.0
        %292 = vmatpush1.msra.mxu0 0.0
        %293 = vmatprep.subr.mxu0 0.0
        %294 = vmatpush1.msra.mxu0 0.0
        %295 = vmatprep.subr.mxu0 0.0
        %296 = vmatpush1.msra.mxu0 0.0
        %297 = vmatprep.subr.mxu0 0.0
        %298 = vmatpush1.msra.mxu0 0.0
        %299 = vmatprep.subr.mxu0 0.0
        %300 = vmatpush1.msra.mxu0 0.0
        %301 = vmatprep.subr.mxu0 0.0
        %302 = vmatpush1.msra.mxu0 0.0
        %303 = vmatprep.subr.mxu0 0.0
        %304 = vmatpush1.msra.mxu0 0.0
        %305 = vmatprep.subr.mxu0 0.0
        %306 = vmatpush1.msra.mxu0 0.0
        %307 = vmatprep.subr.mxu0 0.0
        %308 = vmatpush1.msra.mxu0 0.0
        %309 = vmatprep.subr.mxu0 0.0
        %310 = vmatpush1.msra.mxu0 0.0
        %311 = vmatprep.subr.mxu0 0.0
        %312 = vmatpush1.msra.mxu0 0.0
        %313 = vmatprep.subr.mxu0 0.0
        %314 = vmatpush1.msra.mxu0 0.0
        %315 = vmatprep.subr.mxu0 0.0
        %316 = vmatpush1.msra.mxu0 0.0
        %317 = vmatprep.subr.mxu0 0.0
        %318 = vmatpush1.msra.mxu0 0.0
        %319 = vmatprep.subr.mxu0 0.0
        %320 = vmatpush1.msra.mxu0 0.0
        %321 = vmatprep.subr.mxu0 0.0
        %322 = vmatpush1.msra.mxu0 0.0
        %323 = vmatprep.subr.mxu0 0.0
        %324 = vmatpush1.msra.mxu0 0.0
        %325 = vmatprep.subr.mxu0 0.0
        %326 = vmatpush1.msra.mxu0 0.0
        %327 = vmatprep.subr.mxu0 0.0
        %328 = vmatpush1.msra.mxu0 0.0
        %329 = vmatprep.subr.mxu0 0.0
        %330 = vmatpush1.msra.mxu0 0.0
        %331 = vmatprep.subr.mxu0 0.0
        %332 = vmatpush1.msra.mxu0 0.0
        %333 = vmatprep.subr.mxu0 0.0
        %334 = vmatpush1.msra.mxu0 0.0
        %335 = vmatprep.subr.mxu0 0.0
        %336 = vmatpush1.msra.mxu0 0.0
        %337 = vmatprep.subr.mxu0 0.0
        %338 = vmatpush1.msra.mxu0 0.0
        %339 = vmatprep.subr.mxu0 0.0
        %340 = vmatpush1.msra.mxu0 0.0
        %341 = vmatprep.subr.mxu0 0.0
        %342 = vmatpush1.msra.mxu0 0.0
        %343 = vmatprep.mubr.f32.mxu0 0.0
        %344 = vmatmul.mubr.f32.gmra.mrb[0].mxu0 %v272
        %v345 = vpop.f32.mrb[0].mxu0
        %v346 = vadd.f32 %v266, %v345
        %v347 = vpop.f32.mrb[0].mxu0
        %v348 = vadd.f32 %v266, %v347
        %349 = vdwg.mxu0
        %v350 = vmax.f32 %v346, 0.0
        %v351 = vmax.f32 %v348, 0.0
        %352 = vrot.lane.b32.xlu0 %v350, 17
        %v353 = vpop.permute.xlu0 %352
        %354 = vrot.lane.b32.xlu0 %v351, 17
        %v355 = vpop.permute.xlu0 %354
        %v356 = vlaneseq
        %v357 = vand.u32 %v356, 127
        %vm358 = vcmp.lt.s32.totalorder %v357, 17
        %v359 = vsel %vm358, %v353, %v355
        %v360 = vsel %vm358, %v355, %v353
        %v361 = vlaneseq
        %v362 = vshrl.u32 %v361, 7
        %v363 = vsub.s32 0, %v362
        %v364 = vrot.slane %v258, %v363
        %v365 = vlaneseq
        %v366 = vshrl.u32 %v365, 7
        %v367 = vsub.s32 0, %v366
        %v368 = vrot.slane %v259, %v367
        %v369 = vmul.f32 %v360, %v364
        %v370 = vmul.f32 %v359, %v368
        %371 = vset.pattern.permute.xlu0 0
        %372 = vperm.xlu0 %371, %v257
        %v373 = vpop.permute.xlu0 %372
        %v375 = vmul.f32 %v369, %v373
        %v376 = vmul.f32 %v370, %v373
        %v377 = vadd.f32 %v375, 0.0
        %v378 = vadd.f32 %v376, 0.0
        %379 = vrot.lane.b32.xlu0 %v350, 16
        %v380 = vpop.permute.xlu0 %379
        %381 = vrot.lane.b32.xlu0 %v351, 16
        %v382 = vpop.permute.xlu0 %381
        %vm383 = vcmp.lt.s32.totalorder %v357, 16
        %v384 = vsel %vm383, %v380, %v382
        %v385 = vsel %vm383, %v382, %v380
        %v386 = vlaneseq
        %v387 = vshrl.u32 %v386, 7
        %v388 = vsub.s32 1, %v387
        %v389 = vrot.slane %v258, %v388
        %v390 = vlaneseq
        %v391 = vshrl.u32 %v390, 7
        %v392 = vsub.s32 1, %v391
        %v393 = vrot.slane %v259, %v392
        %v394 = vmul.f32 %v385, %v389
        %v395 = vmul.f32 %v384, %v393
        %396 = vset.pattern.permute.xlu0 1
        %397 = vperm.xlu0 %396, %v257
        %v398 = vpop.permute.xlu0 %397
        %v400 = vmul.f32 %v394, %v398
        %v401 = vmul.f32 %v395, %v398
        %v402 = vadd.f32 %v377, %v400
        %v403 = vadd.f32 %v378, %v401
        %404 = vrot.lane.b32.xlu0 %v350, 15
        %v405 = vpop.permute.xlu0 %404
        %406 = vrot.lane.b32.xlu0 %v351, 15
        %v407 = vpop.permute.xlu0 %406
        %vm408 = vcmp.lt.s32.totalorder %v357, 15
        %v409 = vsel %vm408, %v405, %v407
        %v410 = vsel %vm408, %v407, %v405
        %v411 = vlaneseq
        %v412 = vshrl.u32 %v411, 7
        %v413 = vsub.s32 2, %v412
        %v414 = vrot.slane %v258, %v413
        %v415 = vlaneseq
        %v416 = vshrl.u32 %v415, 7
        %v417 = vsub.s32 2, %v416
        %v418 = vrot.slane %v259, %v417
        %v419 = vmul.f32 %v410, %v414
        %v420 = vmul.f32 %v409, %v418
        %421 = vset.pattern.permute.xlu0 2
        %422 = vperm.xlu0 %421, %v257
        %v423 = vpop.permute.xlu0 %422
        %v425 = vmul.f32 %v419, %v423
        %v426 = vmul.f32 %v420, %v423
        %v427 = vadd.f32 %v402, %v425
        %v428 = vadd.f32 %v403, %v426
        %429 = vrot.lane.b32.xlu0 %v350, 1
        %v430 = vpop.permute.xlu0 %429
        %431 = vrot.lane.b32.xlu0 %v351, 1
        %v432 = vpop.permute.xlu0 %431
        %vm433 = vcmp.lt.s32.totalorder %v357, 1
        %v434 = vsel %vm433, %v430, %v432
        %v435 = vsel %vm433, %v432, %v430
        %v436 = vlaneseq
        %v437 = vshrl.u32 %v436, 7
        %v438 = vsub.s32 3, %v437
        %v439 = vrot.slane %v258, %v438
        %v440 = vlaneseq
        %v441 = vshrl.u32 %v440, 7
        %v442 = vsub.s32 3, %v441
        %v443 = vrot.slane %v259, %v442
        %v444 = vmul.f32 %v435, %v439
        %v445 = vmul.f32 %v434, %v443
        %446 = vset.pattern.permute.xlu0 3
        %447 = vperm.xlu0 %446, %v257
        %v448 = vpop.permute.xlu0 %447
        %v450 = vmul.f32 %v444, %v448
        %v451 = vmul.f32 %v445, %v448
        %v452 = vadd.f32 %v427, %v450
        %v453 = vadd.f32 %v428, %v451
        %v454 = vlaneseq
        %v455 = vshrl.u32 %v454, 7
        %v456 = vsub.s32 4, %v455
        %v457 = vrot.slane %v258, %v456
        %v458 = vlaneseq
        %v459 = vshrl.u32 %v458, 7
        %v460 = vsub.s32 4, %v459
        %v461 = vrot.slane %v259, %v460
        %v462 = vmul.f32 %v350, %v457
        %v463 = vmul.f32 %v351, %v461
        %464 = vset.pattern.permute.xlu0 4
        %465 = vperm.xlu0 %464, %v257
        %v466 = vpop.permute.xlu0 %465
        %v468 = vmul.f32 %v462, %v466
        %v469 = vmul.f32 %v463, %v466
        %v470 = vadd.f32 %v452, %v468
        %v471 = vadd.f32 %v453, %v469
        %472 = vrot.lane.b32.xlu0 %v350, 127
        %v473 = vpop.permute.xlu0 %472
        %474 = vrot.lane.b32.xlu0 %v351, 127
        %v475 = vpop.permute.xlu0 %474
        %vm476 = vcmp.lt.s32.totalorder %v357, 127
        %v477 = vsel %vm476, %v473, %v475
        %v478 = vsel %vm476, %v475, %v473
        %v479 = vlaneseq
        %v480 = vshrl.u32 %v479, 7
        %v481 = vsub.s32 5, %v480
        %v482 = vrot.slane %v258, %v481
        %v483 = vlaneseq
        %v484 = vshrl.u32 %v483, 7
        %v485 = vsub.s32 5, %v484
        %v486 = vrot.slane %v259, %v485
        %v487 = vmul.f32 %v477, %v482
        %v488 = vmul.f32 %v478, %v486
        %489 = vset.pattern.permute.xlu0 5
        %490 = vperm.xlu0 %489, %v257
        %v491 = vpop.permute.xlu0 %490
        %v493 = vmul.f32 %v487, %v491
        %v494 = vmul.f32 %v488, %v491
        %v495 = vadd.f32 %v470, %v493
        %v496 = vadd.f32 %v471, %v494
        %497 = vrot.lane.b32.xlu0 %v350, 113
        %v498 = vpop.permute.xlu0 %497
        %499 = vrot.lane.b32.xlu0 %v351, 113
        %v500 = vpop.permute.xlu0 %499
        %vm501 = vcmp.lt.s32.totalorder %v357, 113
        %v502 = vsel %vm501, %v498, %v500
        %v503 = vsel %vm501, %v500, %v498
        %v504 = vlaneseq
        %v505 = vshrl.u32 %v504, 7
        %v506 = vsub.s32 6, %v505
        %v507 = vrot.slane %v258, %v506
        %v508 = vlaneseq
        %v509 = vshrl.u32 %v508, 7
        %v510 = vsub.s32 6, %v509
        %v511 = vrot.slane %v259, %v510
        %v512 = vmul.f32 %v502, %v507
        %v513 = vmul.f32 %v503, %v511
        %514 = vset.pattern.permute.xlu0 6
        %515 = vperm.xlu0 %514, %v257
        %v516 = vpop.permute.xlu0 %515
        %v518 = vmul.f32 %v512, %v516
        %v519 = vmul.f32 %v513, %v516
        %v520 = vadd.f32 %v495, %v518
        %v521 = vadd.f32 %v496, %v519
        %522 = vrot.lane.b32.xlu0 %v350, 112
        %v523 = vpop.permute.xlu0 %522
        %524 = vrot.lane.b32.xlu0 %v351, 112
        %v525 = vpop.permute.xlu0 %524
        %vm526 = vcmp.lt.s32.totalorder %v357, 112
        %v527 = vsel %vm526, %v523, %v525
        %v528 = vsel %vm526, %v525, %v523
        %v529 = vlaneseq
        %v530 = vshrl.u32 %v529, 7
        %v531 = vsub.s32 7, %v530
        %v532 = vrot.slane %v258, %v531
        %v533 = vlaneseq
        %v534 = vshrl.u32 %v533, 7
        %v535 = vsub.s32 7, %v534
        %v536 = vrot.slane %v259, %v535
        %v537 = vmul.f32 %v527, %v532
        %v538 = vmul.f32 %v528, %v536
        %539 = vset.pattern.permute.xlu0 7
        %540 = vperm.xlu0 %539, %v257
        %v541 = vpop.permute.xlu0 %540
        %v543 = vmul.f32 %v537, %v541
        %v544 = vmul.f32 %v538, %v541
        %v545 = vadd.f32 %v520, %v543
        %v546 = vadd.f32 %v521, %v544
        %547 = vrot.lane.b32.xlu0 %v350, 111
        %v548 = vpop.permute.xlu0 %547
        %549 = vrot.lane.b32.xlu0 %v351, 111
        %v550 = vpop.permute.xlu0 %549
        %vm551 = vcmp.lt.s32.totalorder %v357, 111
        %v552 = vsel %vm551, %v548, %v550
        %v553 = vsel %vm551, %v550, %v548
        %v554 = vlaneseq
        %v555 = vshrl.u32 %v554, 7
        %v556 = vsub.s32 0, %v555
        %v557 = vrot.slane %v260, %v556
        %v558 = vlaneseq
        %v559 = vshrl.u32 %v558, 7
        %v560 = vsub.s32 0, %v559
        %v561 = vrot.slane %v261, %v560
        %v562 = vmul.f32 %v552, %v557
        %v563 = vmul.f32 %v553, %v561
        %564 = vset.pattern.permute.xlu0 8
        %565 = vperm.xlu0 %564, %v257
        %v566 = vpop.permute.xlu0 %565
        %v568 = vmul.f32 %v562, %v566
        %v569 = vmul.f32 %v563, %v566
        %v570 = vadd.f32 %v545, %v568
        %v571 = vadd.f32 %v546, %v569
        %572 = vset.pattern.permute.xlu0 10
        %573 = vperm.xlu0 %572, %v257
        %v574 = vpop.permute.xlu0 %573
        %v576 = vadd.f32 %v570, %v574
        %v577 = vadd.f32 %v571, %v574
        %v578 = vld [vmem:[%s2] sm:$0x3]
        %579 = vset.pattern.permute.xlu0 11
        %580 = vperm.xlu0 %579, %v257
        %v581 = vpop.permute.xlu0 %580
        %v584 = vsel %vm270, %v578, 0
        %v587 = vsel %vm274, %v576, 0
        %v590 = vsel %vm274, %v577, 0
        %592 = vmatprep.subr.mxu0 %v590
        %593 = vmatpush1.msra.mxu0 %v587
        %594 = vmatprep.subr.mxu0 0.0
        %595 = vmatpush1.msra.mxu0 0.0
        %596 = vmatprep.subr.mxu0 0.0
        %597 = vmatpush1.msra.mxu0 0.0
        %598 = vmatprep.subr.mxu0 0.0
        %599 = vmatpush1.msra.mxu0 0.0
        %600 = vmatprep.subr.mxu0 0.0
        %601 = vmatpush1.msra.mxu0 0.0
        %602 = vmatprep.subr.mxu0 0.0
        %603 = vmatpush1.msra.mxu0 0.0
        %604 = vmatprep.subr.mxu0 0.0
        %605 = vmatpush1.msra.mxu0 0.0
        %606 = vmatprep.subr.mxu0 0.0
        %607 = vmatpush1.msra.mxu0 0.0
        %608 = vmatprep.subr.mxu0 0.0
        %609 = vmatpush1.msra.mxu0 0.0
        %610 = vmatprep.subr.mxu0 0.0
        %611 = vmatpush1.msra.mxu0 0.0
        %612 = vmatprep.subr.mxu0 0.0
        %613 = vmatpush1.msra.mxu0 0.0
        %614 = vmatprep.subr.mxu0 0.0
        %615 = vmatpush1.msra.mxu0 0.0
        %616 = vmatprep.subr.mxu0 0.0
        %617 = vmatpush1.msra.mxu0 0.0
        %618 = vmatprep.subr.mxu0 0.0
        %619 = vmatpush1.msra.mxu0 0.0
        %620 = vmatprep.subr.mxu0 0.0
        %621 = vmatpush1.msra.mxu0 0.0
        %622 = vmatprep.subr.mxu0 0.0
        %623 = vmatpush1.msra.mxu0 0.0
        %624 = vmatprep.subr.mxu0 0.0
        %625 = vmatpush1.msra.mxu0 0.0
        %626 = vmatprep.subr.mxu0 0.0
        %627 = vmatpush1.msra.mxu0 0.0
        %628 = vmatprep.subr.mxu0 0.0
        %629 = vmatpush1.msra.mxu0 0.0
        %630 = vmatprep.subr.mxu0 0.0
        %631 = vmatpush1.msra.mxu0 0.0
        %632 = vmatprep.subr.mxu0 0.0
        %633 = vmatpush1.msra.mxu0 0.0
        %634 = vmatprep.subr.mxu0 0.0
        %635 = vmatpush1.msra.mxu0 0.0
        %636 = vmatprep.subr.mxu0 0.0
        %637 = vmatpush1.msra.mxu0 0.0
        %638 = vmatprep.subr.mxu0 0.0
        %639 = vmatpush1.msra.mxu0 0.0
        %640 = vmatprep.subr.mxu0 0.0
        %641 = vmatpush1.msra.mxu0 0.0
        %642 = vmatprep.subr.mxu0 0.0
        %643 = vmatpush1.msra.mxu0 0.0
        %644 = vmatprep.subr.mxu0 0.0
        %645 = vmatpush1.msra.mxu0 0.0
        %646 = vmatprep.subr.mxu0 0.0
        %647 = vmatpush1.msra.mxu0 0.0
        %648 = vmatprep.subr.mxu0 0.0
        %649 = vmatpush1.msra.mxu0 0.0
        %650 = vmatprep.subr.mxu0 0.0
        %651 = vmatpush1.msra.mxu0 0.0
        %652 = vmatprep.subr.mxu0 0.0
        %653 = vmatpush1.msra.mxu0 0.0
        %654 = vmatprep.subr.mxu0 0.0
        %655 = vmatpush1.msra.mxu0 0.0
        %656 = vmatprep.mubr.f32.mxu0 0.0
        %657 = vmatmul.mubr.f32.gmra.mrb[0].mxu0 %v584
        %v658 = vpop.f32.mrb[0].mxu0
        %v659 = vadd.f32 %v581, %v658
        %v660 = vpop.f32.mrb[0].mxu0
        %v661 = vadd.f32 %v581, %v660
        %662 = vdwg.mxu0
        %v663 = vmax.f32 %v659, 0.0
        %v664 = vmax.f32 %v661, 0.0
        %v666 = vsel %vm274, %v663, %v256
        %v667 = vsel %vm274, %v664, %v269
        %v670 = vrot.slane %v666, 1
        %v671 = vrot.slane %v667, 1
        %v674 = vrot.slane %v666, 7
        %v675 = vrot.slane %v667, 7
        %vm678 = vcmask 1040384
        %v679 = vsel %vm678, %v666, %v670
        %v680 = vsel %vm678, %v667, %v671
        %v681 = vsel %vm274, %v679, %v674
        %v682 = vsel %vm274, %v680, %v675
        %vm683 = vcmask 1042432
        %v684 = vsel %vm683, %v681, %v666
        %v685 = vsel %vm683, %v682, %v667
        %v688 = vcombine.low %v684, %v685
        %690 = vst [vmem:[%s255] sm:$0xff] %v688
        %s691 = sand.u32 %s141, 1
        %s692 = scalar_lea.sflag [#allocation4], %s691
        %s693 = sand.u32 %s141, 1
        %s694 = smul.addr %s693, 8
        %s695 = scalar_lea.vmem [#allocation7], %s694
        // Predicated region
        $region49: #{tpu_custom_call.1} parent=39 // pred_check
          %p696 = pneg %p151
        $region50: #{tpu_custom_call.1} parent=39 // pred_check_branch
          %698 = sbr.rel (%p696) target = $region52
        $region51: #{tpu_custom_call.1} parent=39 // pred_region
          %s700 = ssub.s32 128, 128
          %701 = vsyncadd %s692, %s700
          %s702 = smul.addr %s23, 2
          %s703 = smul.addr %s702, 64
          %s704 = scalar_lea.hbm %s5, %s703
          %s706 = sshll.u32 %s695, 4
          %s707 = int_to_ptr.vmem [resolvable:$true] %s706
          %709 = dma.vmem_to_hbm [thread:$0]  %s707, 128, %s704, %s692
        $region52: #{tpu_custom_call.1} parent=39 // pred_fallthru
          _
      $region40: #{tpu_custom_call.1} parent=5 // pred_fallthru
        _
      %p710 = scmp.le.s32.totalorder 2, %s18
      // Predicated region
      $region53: #{tpu_custom_call.1} parent=5 // pred_check
        %p711 = pneg %p710
      $region54: #{tpu_custom_call.1} parent=5 // pred_check_branch
        %713 = sbr.rel (%p711) target = $region56
      $region55: #{tpu_custom_call.1} parent=5 // pred_region
        %s714 = ssub.s32 %s18, 2
        // Predicated region
        $region57: #{tpu_custom_call.1} parent=55 // pred_check
          %p715 = pneg %p157
        $region58: #{tpu_custom_call.1} parent=55 // pred_check_branch
          %717 = sbr.rel (%p715) target = $region60
        $region59: #{tpu_custom_call.1} parent=55 // pred_region
          %s718 = sand.u32 %s142, 1
          %s719 = scalar_lea.sflag [#allocation4], %s718
          %s720 = sand.u32 %s142, 1
          %s721 = smul.addr %s720, 8
          %s722 = scalar_lea.vmem [#allocation7], %s721
          %723 = dma.done %s719, 128
        $region60: #{tpu_custom_call.1} parent=55 // pred_fallthru
          _
      $region56: #{tpu_custom_call.1} parent=5 // pred_fallthru
        _
    $region6: #{tpu_custom_call.1} parent=1 // loop_footer
      %s22 = sadd.s32 1, %s18
    $region7: #{tpu_custom_call.1} parent=1 // loop_footer_branch
      %17 = sbr.rel target = $region3
    $region8: #{tpu_custom_call.1} parent=1 // loop_exit
      _
    %724 = vsyncpa [#allocation3], 1
    %s725 = scalar_lea.sflag [#allocation3], 1
    %726 = vsyncpa %s725, 1
    %727 = vsyncpa [#allocation6], 1
    %728 = vsyncpa [#allocation4], 1
    %s729 = scalar_lea.sflag [#allocation4], 1
    %730 = vsyncpa %s729, 1

</llo_original>
